<compile_context>
chip_gen: v6e
topology: v6e:2x2x1
jax: 0.10.0
libtpu: 0.0.40
codegen_flags: <defaults>
</compile_context>

<pallas_src>
import functools
import math

import jax
import jax.numpy as jnp
from jax.experimental import pallas as pl
from jax.experimental.pallas import tpu as pltpu


def _round_up(x, m):
    return ((x + m - 1) // m) * m


def _pad128(c):
    return _round_up(c, 128)


_VMEM_TILE_BUDGET = 8 << 20      # target per-grid-step working set of the fused block kernels
_VMEM_LIMIT = 32 << 20           # scoped VMEM limit for the fused block kernels


# ----------------------------------------------------------------------------
# Plain matmul (+bias, +ReLU6) kernel: stem im2col and the final 1x1 conv
# ----------------------------------------------------------------------------
def _matmul_bias_act_kernel(x_ref, w_ref, b_ref, o_ref, *, act):
    y = jnp.dot(x_ref[...], w_ref[...], preferred_element_type=jnp.float32) + b_ref[...]
    if act == "relu6":
        y = jnp.clip(y, 0.0, 6.0)
    o_ref[...] = y.astype(o_ref.dtype)


def _pick_tm(M, bytes_per_row):
    """M tile: multiple of 8, >=2 grid blocks, ~<=3MB per-step row traffic, prefer divisors."""
    cap = (3 << 20) // max(1, bytes_per_row)
    cap = max(64, min(2048, cap - cap % 8))
    best, t = 0, 8
    limit = min(cap, M // 2)
    while t <= limit:
        if M % t == 0:
            best = t
        t += 8
    if best:
        return best, M
    if M <= cap:                         # tiny M: pad to two 8-row-aligned blocks
        Mp = _round_up(max(M, 2), 16)
        return Mp // 2, Mp
    Mp = _round_up(M, cap)               # large M without an aligned divisor
    return cap, Mp


def matmul_bias_act(x, w, b, act="none", out_dtype=jnp.bfloat16):
    """y = act(x @ w + b); x (M,K) bf16, w (K,N) bf16, b (N,) f32."""
    M, K = x.shape
    N = w.shape[1]
    tm, Mp = _pick_tm(M, 2 * (K + N))
    if Mp != M:
        x = jnp.pad(x, ((0, Mp - M), (0, 0)))
    y = pl.pallas_call(
        functools.partial(_matmul_bias_act_kernel, act=act),
        grid=(Mp // tm,),
        in_specs=[pl.BlockSpec((tm, K), lambda i: (i, 0)),
                  pl.BlockSpec((K, N), lambda i: (0, 0)),
                  pl.BlockSpec((1, N), lambda i: (0, 0))],
        out_specs=pl.BlockSpec((tm, N), lambda i: (i, 0)),
        out_shape=jax.ShapeDtypeStruct((Mp, N), out_dtype),
        compiler_params=pltpu.CompilerParams(dimension_semantics=("parallel",)),
        cost_estimate=pl.CostEstimate(
            flops=2 * Mp * K * N, transcendentals=0,
            bytes_accessed=Mp * K * 2 + K * N * 2 + N * 4 + Mp * N * 2),
    )(x, w, b.reshape(1, N).astype(jnp.float32))
    return y[:M] if Mp != M else y


# ----------------------------------------------------------------------------
# Fused InvertedResidual kernels (expand -> depthwise -> project [+ residual])
# ----------------------------------------------------------------------------
def _dw3x3_proj(e, xt, dw_ref, db_ref, pw_ref, pb_ref, o_ref, use_res):
    """Stride-1 depthwise 3x3 (+bias, ReLU6) on the halo'd f32 tile, then 1x1 projection."""
    thp2, wp2, hid = e.shape
    th, w = thp2 - 2, wp2 - 2
    acc = jnp.zeros((th, w, hid), jnp.float32)
    for kh in range(3):
        for kw in range(3):
            acc = acc + e[kh:kh + th, kw:kw + w, :] * dw_ref[kh, kw, :]
    acc = jnp.clip(acc + db_ref[...], 0.0, 6.0)
    y = jnp.dot(acc.reshape(th * w, hid).astype(jnp.bfloat16), pw_ref[...],
                preferred_element_type=jnp.float32) + pb_ref[...]
    y = y.reshape(th, w, y.shape[-1])
    if use_res:
        y = y + xt[1:1 + th, 1:1 + w, :].astype(jnp.float32)
    o_ref[0] = y.astype(o_ref.dtype)


def _invres_s1_exp_kernel(x_ref, ew_ref, eb_ref, dw_ref, db_ref, pw_ref, pb_ref, o_ref,
                          *, use_res):
    # x_ref: (1, th+2, W+2, cin_p) bf16 halo'd, spatially zero-padded input tile.
    xt = x_ref[0]
    thp2, wp2, cin = xt.shape
    th, w = thp2 - 2, wp2 - 2
    hid = ew_ref.shape[1]
    # expand 1x1 + ReLU6 (f32 accumulation; stays f32 for the depthwise -> no per-tap casts)
    e = jnp.dot(xt.reshape(thp2 * wp2, cin), ew_ref[...], preferred_element_type=jnp.float32)
    e = jnp.clip(e + eb_ref[...], 0.0, 6.0).reshape(thp2, wp2, hid)
    # the 1x1 expand turned the zero-padding ring into relu6(bias); zero it back
    col = jax.lax.broadcasted_iota(jnp.int32, (1, wp2, 1), 1)
    row = jax.lax.broadcasted_iota(jnp.int32, (thp2, 1, 1), 0)
    hblk, nhb = pl.program_id(1), pl.num_programs(1)
    lo = jnp.where(hblk == 0, 1, 0)
    hi = jnp.where(hblk == nhb - 1, th, th + 1)
    e = jnp.where((col >= 1) & (col <= w) & (row >= lo) & (row <= hi), e, 0.0)
    _dw3x3_proj(e, xt, dw_ref, db_ref, pw_ref, pb_ref, o_ref, use_res)


def _invres_s1_noexp_kernel(x_ref, dw_ref, db_ref, pw_ref, pb_ref, o_ref, *, use_res):
    xt = x_ref[0]
    _dw3x3_proj(xt.astype(jnp.float32), xt, dw_ref, db_ref, pw_ref, pb_ref, o_ref, use_res)


def _invres_s2_kernel(x_ref, ew_ref, eb_ref, dw_ref, db_ref, pw_ref, pb_ref, o_ref):
    # x_ref: (4, tho+1, Wq, cin_p) phase-decomposed window of the spatially zero-padded input;
    # phase p = 2*(kh%2) + (kw%2) holds x_pad[2a + kh%2, 2c + kw%2].
    q = x_ref[...]
    _, thp1, wq, cin = q.shape
    tho, wo = thp1 - 1, wq - 1
    hid = ew_ref.shape[1]
    e = jnp.dot(q.reshape(4 * thp1 * wq, cin), ew_ref[...], preferred_element_type=jnp.float32)
    e = jnp.clip(e + eb_ref[...], 0.0, 6.0).reshape(4, thp1, wq, hid)
    # zero the positions that came from the image zero-padding ring
    p = jax.lax.broadcasted_iota(jnp.int32, (4, 1, 1, 1), 0)
    a = jax.lax.broadcasted_iota(jnp.int32, (1, thp1, 1, 1), 1)
    c = jax.lax.broadcasted_iota(jnp.int32, (1, 1, wq, 1), 2)
    ph, pw = p // 2, p % 2
    hblk, nhb = pl.program_id(1), pl.num_programs(1)
    pad = (((ph == 0) & (a == 0) & (hblk == 0))
           | ((ph == 1) & (a == tho) & (hblk == nhb - 1))
           | ((pw == 0) & (c == 0))
           | ((pw == 1) & (c == wq - 1)))
    e = jnp.where(pad, 0.0, e)
    # stride-2 depthwise via exact phase taps (no redundant MACs), then project
    acc = jnp.zeros((tho, wo, hid), jnp.float32)
    for kh in range(3):
        for kw in range(3):
            tap = e[(kh % 2) * 2 + (kw % 2),
                    kh // 2:kh // 2 + tho, kw // 2:kw // 2 + wo, :]
            acc = acc + tap * dw_ref[kh, kw, :]
    acc = jnp.clip(acc + db_ref[...], 0.0, 6.0)
    y = jnp.dot(acc.reshape(tho * wo, hid).astype(jnp.bfloat16), pw_ref[...],
                preferred_element_type=jnp.float32) + pb_ref[...]
    o_ref[0] = y.reshape(tho, wo, -1).astype(o_ref.dtype)


def _pick_th_s1(H, W, cin_p, hid_p, cout_p, budget=_VMEM_TILE_BUDGET):
    wbytes = 4 * (cin_p * hid_p + hid_p * cout_p) + 9 * hid_p * 4
    def est(t):
        return (2 * (t + 2) * (W + 2) * cin_p * 2      # halo'd input, double buffered
                + 2 * (t + 2) * (W + 2) * hid_p * 4    # expanded f32 (+ reshape copy)
                + 3 * t * W * hid_p * 4                # dw accumulator + tap temporaries
                + 2 * t * W * cout_p * 2               # output, double buffered
                + wbytes)
    for t in sorted((d for d in range(1, H + 1) if H % d == 0), reverse=True):
        if est(t) <= budget:
            return t
    return 1


def _pick_th_s2(Ho, Wo, cin_p, hid_p, cout_p, budget=_VMEM_TILE_BUDGET):
    wq = Wo + 1
    wbytes = 4 * (cin_p * hid_p + hid_p * cout_p) + 9 * hid_p * 4
    def est(t):
        return (2 * 4 * (t + 1) * wq * cin_p * 2
                + 2 * 4 * (t + 1) * wq * hid_p * 4
                + 3 * t * Wo * hid_p * 4
                + 2 * t * Wo * cout_p * 2 + wbytes)
    for t in sorted((d for d in range(1, Ho + 1) if Ho % d == 0), reverse=True):
        if est(t) <= budget:
            return t
    return 1


def _const_spec(shape):
    return pl.BlockSpec(shape, lambda i, j, _s=shape: (0,) * len(_s))


def invres_s1(x, layer):
    n, h, w, cin_p = x.shape
    dw_w, dw_b = layer["dw_w"], layer["dw_b"]
    pw, pb = layer["proj_w"], layer["proj_b"]
    hid_p, cout_p = dw_w.shape[-1], pw.shape[1]
    has_exp = "expand_w" in layer
    use_res = layer["use_res"]

    th = _pick_th_s1(h, w, cin_p, hid_p, cout_p)
    nh = h // th
    xp = jnp.pad(x, ((0, 0), (1, 1), (1, 1), (0, 0)))
    if nh == 1:
        x_halo = xp
    else:  # overlapping H windows with a 1-row halo (built on the narrow input)
        x_halo = jnp.stack([xp[:, i * th:i * th + th + 2] for i in range(nh)], axis=1)
        x_halo = x_halo.reshape(n * nh, th + 2, w + 2, cin_p)

    in_specs = [pl.BlockSpec((1, th + 2, w + 2, cin_p), lambda i, j: (i * nh + j, 0, 0, 0))]
    args = [x_halo]
    if has_exp:
        in_specs += [_const_spec((cin_p, hid_p)), _const_spec((1, hid_p))]
        args += [layer["expand_w"], layer["expand_b"].reshape(1, hid_p)]
        kernel = functools.partial(_invres_s1_exp_kernel, use_res=use_res)
    else:
        kernel = functools.partial(_invres_s1_noexp_kernel, use_res=use_res)
    in_specs += [_const_spec((3, 3, hid_p)), _const_spec((1, hid_p)),
                 _const_spec((hid_p, cout_p)), _const_spec((1, cout_p))]
    args += [dw_w, dw_b.reshape(1, hid_p), pw, pb.reshape(1, cout_p)]

    flops = n * (18 * h * w * hid_p + 2 * h * w * hid_p * cout_p)
    if has_exp:
        flops += n * 2 * (h + 2) * (w + 2) * cin_p * hid_p
    bytes_acc = int(x_halo.size) * 2 + n * h * w * cout_p * 2
    bytes_acc += sum(int(a.size) * a.dtype.itemsize for a in args[1:])
    return pl.pallas_call(
        kernel,
        grid=(n, nh),
        in_specs=in_specs,
        out_specs=pl.BlockSpec((1, th, w, cout_p), lambda i, j: (i, j, 0, 0)),
        out_shape=jax.ShapeDtypeStruct((n, h, w, cout_p), jnp.bfloat16),
        compiler_params=pltpu.CompilerParams(
            dimension_semantics=("parallel", "parallel"),
            vmem_limit_bytes=_VMEM_LIMIT),
        cost_estimate=pl.CostEstimate(flops=int(flops), transcendentals=0,
                                      bytes_accessed=int(bytes_acc)),
    )(*args)


def invres_s2(x, layer):
    n, h, w, cin_p = x.shape
    assert h % 2 == 0 and w % 2 == 0, "stride-2 block expects even spatial dims"
    ho, wo = h // 2, w // 2
    hq, wq = ho + 1, wo + 1
    dw_w, dw_b = layer["dw_w"], layer["dw_b"]
    pw, pb = layer["proj_w"], layer["proj_b"]
    hid_p, cout_p = dw_w.shape[-1], pw.shape[1]

    tho = _pick_th_s2(ho, wo, cin_p, hid_p, cout_p)
    nh = ho // tho
    xp = jnp.pad(x, ((0, 0), (1, 1), (1, 1), (0, 0)))
    # phase decomposition on the narrow input: q[n, 2*ph+pw, a, c, :] = xp[n, 2a+ph, 2c+pw, :]
    q = xp.reshape(n, hq, 2, wq, 2, cin_p).transpose(0, 2, 4, 1, 3, 5).reshape(n, 4, hq, wq, cin_p)
    if nh == 1:
        x_win = q.reshape(n * 4, hq, wq, cin_p)
    else:  # overlapping 1-row-halo windows along the phase-H axis
        x_win = jnp.stack([q[:, :, i * tho:i * tho + tho + 1] for i in range(nh)], axis=1)
        x_win = x_win.reshape(n * nh * 4, tho + 1, wq, cin_p)

    in_specs = [pl.BlockSpec((4, tho + 1, wq, cin_p), lambda i, j: (i * nh + j, 0, 0, 0)),
                _const_spec((cin_p, hid_p)), _const_spec((1, hid_p)),
                _const_spec((3, 3, hid_p)), _const_spec((1, hid_p)),
                _const_spec((hid_p, cout_p)), _const_spec((1, cout_p))]
    args = [x_win, layer["expand_w"], layer["expand_b"].reshape(1, hid_p),
            dw_w, dw_b.reshape(1, hid_p), pw, pb.reshape(1, cout_p)]
    flops = n * (2 * 4 * hq * wq * cin_p * hid_p + 18 * ho * wo * hid_p
                 + 2 * ho * wo * hid_p * cout_p)
    bytes_acc = int(x_win.size) * 2 + n * ho * wo * cout_p * 2
    bytes_acc += sum(int(a.size) * a.dtype.itemsize for a in args[1:])
    return pl.pallas_call(
        _invres_s2_kernel,
        grid=(n, nh),
        in_specs=in_specs,
        out_specs=pl.BlockSpec((1, tho, wo, cout_p), lambda i, j: (i, j, 0, 0)),
        out_shape=jax.ShapeDtypeStruct((n, ho, wo, cout_p), jnp.bfloat16),
        compiler_params=pltpu.CompilerParams(
            dimension_semantics=("parallel", "parallel"),
            vmem_limit_bytes=_VMEM_LIMIT),
        cost_estimate=pl.CostEstimate(flops=int(flops), transcendentals=0,
                                      bytes_accessed=int(bytes_acc)),
    )(*args)


# ----------------------------------------------------------------------------
# Fused global average pool + fc_pose
# ----------------------------------------------------------------------------
def _pool_fc_kernel(x_ref, w_ref, b_ref, o_ref):
    pooled = jnp.mean(x_ref[...].astype(jnp.float32), axis=1)          # (N, C)
    y = jnp.dot(pooled.astype(jnp.bfloat16), w_ref[...], preferred_element_type=jnp.float32)
    o_ref[...] = y + b_ref[...]


def pool_fc(x3, w, b):
    """x3: (N, HW, C) bf16 -> (N, Fp) f32; single fused kernel, lane-dense padded output."""
    n, hw, c = x3.shape
    fp = w.shape[1]
    return pl.pallas_call(
        _pool_fc_kernel,
        grid=(1,),
        in_specs=[pl.BlockSpec((n, hw, c), lambda i: (0, 0, 0)),
                  pl.BlockSpec((c, fp), lambda i: (0, 0)),
                  pl.BlockSpec((1, fp), lambda i: (0, 0))],
        out_specs=pl.BlockSpec((n, fp), lambda i: (0, 0)),
        out_shape=jax.ShapeDtypeStruct((n, fp), jnp.float32),
        cost_estimate=pl.CostEstimate(flops=2 * n * c * fp + n * hw * c, transcendentals=0,
                                      bytes_accessed=n * hw * c * 2 + c * fp * 2 + n * fp * 4),
    )(x3, w, b.reshape(1, fp))


# ----------------------------------------------------------------------------
# JAX glue: stem, 1x1 conv, BN fold, parameter construction, forward
# ----------------------------------------------------------------------------
def pointwise(x, w, b, act):
    n, h, w_, c = x.shape
    y = matmul_bias_act(x.reshape(n * h * w_, c), w, b, act=act)
    return y.reshape(n, h, w_, -1)


def conv3x3_s2_stem(x, w_flat, b):
    """Regular 3x3 conv, stride 2, padding 1, via im2col (glue) + Pallas matmul."""
    n, h, w, cin = x.shape
    xp = jnp.pad(x, ((0, 0), (1, 1), (1, 1), (0, 0)))
    ho = (h - 1) // 2 + 1
    wo = (w - 1) // 2 + 1
    patches = [xp[:, kh:kh + 2 * ho - 1:2, kw:kw + 2 * wo - 1:2, :]
               for kh in range(3) for kw in range(3)]
    xcol = jnp.concatenate(patches, axis=-1)          # (n, ho, wo, 9*cin), (kh,kw,cin) order
    y = matmul_bias_act(xcol.reshape(n * ho * wo, 9 * cin), w_flat, b, act="relu6")
    return y.reshape(n, ho, wo, -1)


def fold_bn(w, gamma, beta, mean, var, eps=1e-5):
    s = gamma / jnp.sqrt(var + eps)
    return w * s, beta - mean * s


class Init:
    def __init__(self, seed):
        self._key = jax.random.PRNGKey(seed)

    def normal(self, shape, scale=1.0):
        self._key, sub = jax.random.split(self._key)
        return (scale * jax.random.normal(sub, shape)).astype(jnp.float32)


def build_params(seed=0, feat_dim=12):
    rng = Init(seed)

    def conv_bn(shape_w, fan_in):
        cout = shape_w[-1]
        w = rng.normal(shape_w, 1.0 / math.sqrt(fan_in))
        gamma = 1.0 + 0.05 * rng.normal((cout,))
        beta = 0.05 * rng.normal((cout,))
        mean = jnp.zeros((cout,), jnp.float32)
        var = jnp.ones((cout,), jnp.float32)
        return fold_bn(w, gamma, beta, mean, var)

    def pad_pw(w, b, kin_pad, nout_pad):
        kin, nout = w.shape
        w = jnp.pad(w, ((0, kin_pad - kin), (0, nout_pad - nout)))
        b = jnp.pad(b, (0, nout_pad - nout))
        return w.astype(jnp.bfloat16), b.astype(jnp.float32)

    def pad_dw(w, b, c_pad):
        c = w.shape[-1]
        w = jnp.pad(w, ((0, 0), (0, 0), (0, c_pad - c)))
        b = jnp.pad(b, (0, c_pad - c))
        return w.astype(jnp.float32), b.astype(jnp.float32)

    features = []
    # features[0]: ConvBNReLU(3, 32, kernel=3, stride=2); N padded 32 -> 128
    w, b = conv_bn((3, 3, 3, 32), 3 * 3 * 3)
    w_flat, b = pad_pw(w.reshape(9 * 3, 32), b, 9 * 3, _pad128(32))
    features.append({"kind": "conv_stem", "w": w_flat, "b": b, "c_orig": 32})

    # features[1..17]: InvertedResidual blocks (MobileNetV2 config)
    settings = [(1, 16, 1, 1), (6, 24, 2, 2), (6, 32, 3, 2), (6, 64, 4, 2),
                (6, 96, 3, 1), (6, 160, 3, 2), (6, 320, 1, 1)]
    cin = 32
    for t, c, num, s in settings:
        for j in range(num):
            stride = s if j == 0 else 1
            hidden = cin * t
            layer = {"kind": "invres", "stride": stride,
                     "use_res": (stride == 1 and cin == c), "c_orig": c}
            if t != 1:
                ew, eb = conv_bn((cin, hidden), cin)
                layer["expand_w"], layer["expand_b"] = pad_pw(ew, eb, _pad128(cin), _pad128(hidden))
            dw, db = conv_bn((3, 3, hidden), 9)
            layer["dw_w"], layer["dw_b"] = pad_dw(dw, db, _pad128(hidden))
            pw_, pb = conv_bn((hidden, c), hidden)
            layer["proj_w"], layer["proj_b"] = pad_pw(pw_, pb, _pad128(hidden), _pad128(c))
            features.append(layer)
            cin = c

    # features[18]: ConvBNReLU(320, 1280, kernel=1)
    w, b = conv_bn((cin, 1280), cin)
    w, b = pad_pw(w, b, _pad128(cin), 1280)
    features.append({"kind": "conv1x1", "w": w, "b": b, "c_orig": 1280})

    fp = _pad128(feat_dim)
    fc_w = rng.normal((1280, feat_dim), 1.0 / math.sqrt(1280))
    fc_w = jnp.pad(fc_w, ((0, 0), (0, fp - feat_dim))).astype(jnp.bfloat16)
    fc_b = jnp.pad(0.01 * rng.normal((feat_dim,)), (0, fp - feat_dim)).astype(jnp.float32)
    return {"features": features, "fc_w": fc_w, "fc_b": fc_b, "feat_dim": feat_dim}


def apply_layer(layer, x):
    kind = layer["kind"]
    if kind == "conv_stem":
        return conv3x3_s2_stem(x, layer["w"], layer["b"])
    if kind == "conv1x1":
        return pointwise(x, layer["w"], layer["b"], act="relu6")
    if layer["stride"] == 1:
        return invres_s1(x, layer)
    return invres_s2(x, layer)


def posenet_v2_forward(params, x_nchw, upsampleH=224, upsampleW=224,
                       isTrain=False, isSingleStream=False):
    """Mirrors PoseNetV2.forward: returns (feat_out, predict)."""
    x = jnp.transpose(x_nchw, (0, 2, 3, 1)).astype(jnp.bfloat16)   # NCHW -> NHWC, bf16
    feat_out = []
    for i, layer in enumerate(params["features"]):
        x = apply_layer(layer, x)
        if isTrain and i == 17:
            c_orig = layer["c_orig"]
            feat_nchw = jnp.transpose(x[..., :c_orig].astype(jnp.float32), (0, 3, 1, 2))
            if isSingleStream:
                feature = jnp.stack([feat_nchw])
            else:
                bsz = feat_nchw.shape[0]
                feature = jnp.stack([feat_nchw[:bsz // 2], feat_nchw[bsz // 2:]])
            feat_out.append(feature)
    n, h, w, c = x.shape
    predict = pool_fc(x.reshape(n, h * w, c), params["fc_w"], params["fc_b"])
    return feat_out, predict[:, :params["feat_dim"]]


# ----------------------------------------------------------------------------
if __name__ == "__main__":
    key = jax.random.PRNGKey(0)
    # 2B x C x H x W  (B=1 siamese pair); 32x32 -> final 1x1 after the five stride-2 stages
    x = jax.random.normal(key, (2, 3, 32, 32), jnp.float32)

    params = build_params(seed=0, feat_dim=12)
    feat_out, predict = posenet_v2_forward(params, x, isTrain=True, isSingleStream=False)

    predict = jax.block_until_ready(predict)
    feat_out = [jax.block_until_ready(f) for f in feat_out]

    assert predict.shape == (2, 12), predict.shape
    assert len(feat_out) == 1 and feat_out[0].shape == (2, 1, 320, 1, 1), feat_out[0].shape
    assert bool(jnp.all(jnp.isfinite(predict)))
    print("KERNEL_OK")
</pallas_src>

<mosaic_0001>
module attributes {stable_mosaic.version = 11 : i64} {
  func.func @_matmul_bias_act_kernel(%arg0: i32, %arg1: memref<256x27xbf16, #tpu.memory_space<vmem>>, %arg2: memref<27x128xbf16, #tpu.memory_space<vmem>>, %arg3: memref<1x128xf32, #tpu.memory_space<vmem>>, %arg4: memref<256x128xbf16, #tpu.memory_space<vmem>>) attributes {dimension_semantics = [#tpu.dimension_semantics<parallel>], iteration_bounds = array<i64: 2>, scalar_prefetch = 0 : i64, scratch_operands = 0 : i64, tpu.core_type = #tpu.core_type<tc>, window_params = [{transform_indices = @transform_0, window_bounds = array<i64: 256, 27>}, {pipeline_mode = #tpu.pipeline_mode<synchronous>, transform_indices = @transform_1, window_bounds = array<i64: 27, 128>}, {pipeline_mode = #tpu.pipeline_mode<synchronous>, transform_indices = @transform_2, window_bounds = array<i64: 1, 128>}, {transform_indices = @transform_3, window_bounds = array<i64: 256, 128>}]} {
    %c0 = arith.constant 0 : index
    %c0_0 = arith.constant 0 : index
    %0 = vector.load %arg1[%c0, %c0_0] : memref<256x27xbf16, #tpu.memory_space<vmem>>, vector<256x27xbf16>
    %c0_1 = arith.constant 0 : index
    %c0_2 = arith.constant 0 : index
    %1 = vector.load %arg2[%c0_1, %c0_2] : memref<27x128xbf16, #tpu.memory_space<vmem>>, vector<27x128xbf16>
    %cst = arith.constant dense<0.000000e+00> : vector<256x128xf32>
    %2 = tpu.matmul %0, %1, %cst {dimension_numbers = #tpu.dot_dimension_numbers<[1], [0], [0], [1], [0, 0, 1, 1], [], []>} : vector<256x27xbf16>, vector<27x128xbf16>, vector<256x128xf32> -> vector<256x128xf32>
    %c0_3 = arith.constant 0 : index
    %c0_4 = arith.constant 0 : index
    %3 = vector.load %arg3[%c0_3, %c0_4] : memref<1x128xf32, #tpu.memory_space<vmem>>, vector<1x128xf32>
    %4 = vector.broadcast %3 : vector<1x128xf32> to vector<256x128xf32>
    %5 = arith.addf %2, %4 : vector<256x128xf32>
    %cst_5 = arith.constant 0.000000e+00 : f32
    %cst_6 = arith.constant 6.000000e+00 : f32
    %6 = vector.broadcast %cst_5 : f32 to vector<256x128xf32>
    %7 = arith.maximumf %6, %5 : vector<256x128xf32>
    %8 = vector.broadcast %cst_6 : f32 to vector<256x128xf32>
    %9 = arith.minimumf %8, %7 : vector<256x128xf32>
    %10 = arith.truncf %9 : vector<256x128xf32> to vector<256x128xbf16>
    %c0_7 = arith.constant 0 : index
    %c0_8 = arith.constant 0 : index
    %11 = vector.load %arg4[%c0_7, %c0_8] : memref<256x128xbf16, #tpu.memory_space<vmem>>, vector<256x128xbf16>
    tpu.vector_store %arg4[%c0_7, %c0_8], %10 {strides = array<i32>} : memref<256x128xbf16, #tpu.memory_space<vmem>>, vector<256x128xbf16>,
    return
  }
  func.func @transform_0(%arg0: i32) -> (i32, i32) {
    %c0_i32 = arith.constant 0 : i32
    %c0_i32_0 = arith.constant 0 : i32
    return %arg0, %c0_i32 : i32, i32
  }
  func.func @transform_1(%arg0: i32) -> (i32, i32) {
    %c0_i32 = arith.constant 0 : i32
    %c0_i32_0 = arith.constant 0 : i32
    %c0_i32_1 = arith.constant 0 : i32
    return %c0_i32, %c0_i32_0 : i32, i32
  }
  func.func @transform_2(%arg0: i32) -> (i32, i32) {
    %c0_i32 = arith.constant 0 : i32
    %c0_i32_0 = arith.constant 0 : i32
    %c0_i32_1 = arith.constant 0 : i32
    return %c0_i32, %c0_i32_0 : i32, i32
  }
  func.func @transform_3(%arg0: i32) -> (i32, i32) {
    %c0_i32 = arith.constant 0 : i32
    %c0_i32_0 = arith.constant 0 : i32
    return %arg0, %c0_i32 : i32, i32
  }
}

</mosaic_0001>

<llo_original>
// kernel: tpu_custom_call.1
$region0: #{tpu_custom_call.1}
  #allocation0 [shape = 'u32[]', space=smem, size = 0x4, offset = 0x4, fixed_abs, tag = 'smem constant byte address 0x4 - core index']
  #allocation1 [shape = 'u32[144,128]{1,0:T(1,128)}', space=vmem, size = 0x12000, scoped, tag = 'internal scratch']
  %s0 = inlined_call_operand.vmem [shape: bf16[512,27], index: 0, kind: input, shape index: {}]
  %s1 = inlined_call_operand.vmem [shape: bf16[27,128], index: 1, kind: input, shape index: {}]
  %s2 = inlined_call_operand.vmem [shape: f32[1,128], index: 2, kind: input, shape index: {}]
  %s3 = inlined_call_operand.hbm [shape: bf16[512,128], index: 3, kind: output, shape index: {}]
  %s4 = sld [smem:[#allocation0]]
  $region45: #{tpu_custom_call.1} parent=0
    _
  %s6 = ssub.s32 1, %s4
  %s7 = scalar_select 0, %s6, %s4
  $region1: #{tpu_custom_call.1} parent=0
    #allocation2 [shape = 'u8[131072]{0}', space=vmem, size = 0x20000, scoped, tag = 'output window, operand 0']
    #allocation3 [shape = 's32[2]{0}', space=sflag, size = 0x8, scoped, tag = 'scoped memory for tpu_custom_call.1']
    %8 = vsyncpa [#allocation3], 0
    %s9 = scalar_lea.sflag [#allocation3], 1
    %10 = vsyncpa %s9, 0
    loop: start=0, step=1, limit=4
    $region2: #{tpu_custom_call.1} parent=1 // loop_pre_header
      _
    $region3: #{tpu_custom_call.1} parent=1 // loop_header
      %s12 = sphi 0, %s16
      %p13 = scmp.ge.s32.totalorder %s12, 4
      %s22 = sphi 0, %s24
      %s25 = sphi 0, %s22
      %s26 = sphi 0, %s25
      %s42 = sphi 0, %s26
      %s46 = sphi 0, %s46
      %s48 = sphi 0, %s46
      %s49 = sphi 0, %s48
      %s63 = sphi 0, %s49
      %s67 = sphi 0, %s67
      %s69 = sphi 0, %s67
      %s70 = sphi 0, %s69
      %s84 = sphi 0, %s70
      %s90 = sphi 0, %s92
      %s93 = sphi 0, %s90
      %s94 = sphi 0, %s93
      %s110 = sphi 0, %s94
    $region4: #{tpu_custom_call.1} parent=1 // loop_header_branch
      %15 = sbr.rel (%p13) target = $region8
    $region5: #{tpu_custom_call.1} parent=1 // loop_body
      %s17 = ssub.s32 %s12, 1
      %s18 = ssub.s32 %s12, 2
      %s19 = sadd.s32 %s12, 1
      %s20 = ssub.s32 %s12, %s19
      %p21 = scmp.eq.s32.totalorder %s20, 0
      %s23 = sadd.s32 %s22, 1
      %s24 = scalar_select %p21, %s22, %s23
      %p27 = pneg %p21
      %p28 = scmp.eq.s32.totalorder %s12, 1
      %p29 = por %p27, %p28
      %p30 = scmp.ne.s32.totalorder %s22, %s25
      %p31 = scmp.eq.s32.totalorder %s12, 0
      %p32 = por %p30, %p31
      %p33 = scmp.ne.s32.totalorder %s22, %s25
      %p34 = scmp.eq.s32.totalorder %s17, 1
      %p35 = por %p33, %p34
      %p36 = scmp.ne.s32.totalorder %s25, %s26
      %p37 = scmp.eq.s32.totalorder %s17, 0
      %p38 = por %p36, %p37
      %p39 = scmp.ne.s32.totalorder %s25, %s26
      %p40 = scmp.eq.s32.totalorder %s18, 1
      %p41 = por %p39, %p40
      %p43 = scmp.ne.s32.totalorder %s26, %s42
      %p44 = scmp.eq.s32.totalorder %s18, 0
      %p45 = por %p43, %p44
      %s47 = sadd.s32 %s46, 1
      %p50 = scmp.eq.s32.totalorder %s12, 1
      %p51 = scmp.ne.s32.totalorder %s46, %s48
      %p52 = scmp.eq.s32.totalorder %s12, 0
      %p53 = por %p51, %p52
      %p54 = scmp.ne.s32.totalorder %s46, %s48
      %p55 = scmp.eq.s32.totalorder %s17, 1
      %p56 = por %p54, %p55
      %p57 = scmp.ne.s32.totalorder %s48, %s49
      %p58 = scmp.eq.s32.totalorder %s17, 0
      %p59 = por %p57, %p58
      %p60 = scmp.ne.s32.totalorder %s48, %s49
      %p61 = scmp.eq.s32.totalorder %s18, 1
      %p62 = por %p60, %p61
      %p64 = scmp.ne.s32.totalorder %s49, %s63
      %p65 = scmp.eq.s32.totalorder %s18, 0
      %p66 = por %p64, %p65
      %s68 = sadd.s32 %s67, 1
      %p71 = scmp.eq.s32.totalorder %s12, 1
      %p72 = scmp.ne.s32.totalorder %s67, %s69
      %p73 = scmp.eq.s32.totalorder %s12, 0
      %p74 = por %p72, %p73
      %p75 = scmp.ne.s32.totalorder %s67, %s69
      %p76 = scmp.eq.s32.totalorder %s17, 1
      %p77 = por %p75, %p76
      %p78 = scmp.ne.s32.totalorder %s69, %s70
      %p79 = scmp.eq.s32.totalorder %s17, 0
      %p80 = por %p78, %p79
      %p81 = scmp.ne.s32.totalorder %s69, %s70
      %p82 = scmp.eq.s32.totalorder %s18, 1
      %p83 = por %p81, %p82
      %p85 = scmp.ne.s32.totalorder %s70, %s84
      %p86 = scmp.eq.s32.totalorder %s18, 0
      %p87 = por %p85, %p86
      %s88 = ssub.s32 %s12, %s19
      %p89 = scmp.eq.s32.totalorder %s88, 0
      %s91 = sadd.s32 %s90, 1
      %s92 = scalar_select %p89, %s90, %s91
      %p95 = pneg %p89
      %p96 = scmp.eq.s32.totalorder %s12, 1
      %p97 = por %p95, %p96
      %p98 = scmp.ne.s32.totalorder %s90, %s93
      %p99 = scmp.eq.s32.totalorder %s12, 0
      %p100 = por %p98, %p99
      %p101 = scmp.ne.s32.totalorder %s90, %s93
      %p102 = scmp.eq.s32.totalorder %s17, 1
      %p103 = por %p101, %p102
      %p104 = scmp.ne.s32.totalorder %s93, %s94
      %p105 = scmp.eq.s32.totalorder %s17, 0
      %p106 = por %p104, %p105
      %p107 = scmp.ne.s32.totalorder %s93, %s94
      %p108 = scmp.eq.s32.totalorder %s18, 1
      %p109 = por %p107, %p108
      %p111 = scmp.ne.s32.totalorder %s94, %s110
      %p112 = scmp.eq.s32.totalorder %s18, 0
      %p113 = por %p111, %p112
      %p114 = scmp.le.s32.totalorder 1, %s12
      %p115 = scmp.lt.s32.totalorder %s12, 3
      %p116 = pnand %p114, %p115
      %p117 = pneg %p116
      // Predicated region
      $region9: #{tpu_custom_call.1} parent=5 // pred_check
        _
      $region10: #{tpu_custom_call.1} parent=5 // pred_check_branch
        %119 = sbr.rel (%p116) target = $region12
      $region11: #{tpu_custom_call.1} parent=5 // pred_region
        %s120 = ssub.s32 %s12, 1
        // Predicated region
        $region13: #{tpu_custom_call.1} parent=11 // pred_check
          %p121 = pneg %p59
        $region14: #{tpu_custom_call.1} parent=11 // pred_check_branch
          %123 = sbr.rel (%p121) target = $region16
        $region15: #{tpu_custom_call.1} parent=11 // pred_region
          _
        $region16: #{tpu_custom_call.1} parent=11 // pred_fallthru
          _
        // Predicated region
        $region17: #{tpu_custom_call.1} parent=11 // pred_check
          %p124 = pneg %p80
        $region18: #{tpu_custom_call.1} parent=11 // pred_check_branch
          %126 = sbr.rel (%p124) target = $region20
        $region19: #{tpu_custom_call.1} parent=11 // pred_region
          _
        $region20: #{tpu_custom_call.1} parent=11 // pred_fallthru
          _
      $region12: #{tpu_custom_call.1} parent=5 // pred_fallthru
        _
      %p127 = scmp.lt.s32.totalorder %s12, 2
      // Predicated region
      $region21: #{tpu_custom_call.1} parent=5 // pred_check
        %p128 = pneg %p127
      $region22: #{tpu_custom_call.1} parent=5 // pred_check_branch
        %130 = sbr.rel (%p128) target = $region24
      $region23: #{tpu_custom_call.1} parent=5 // pred_region
        // Predicated region
        $region25: #{tpu_custom_call.1} parent=23 // pred_check
          %p131 = pneg %p32
        $region26: #{tpu_custom_call.1} parent=23 // pred_check_branch
          %133 = sbr.rel (%p131) target = $region28
        $region27: #{tpu_custom_call.1} parent=23 // pred_region
          %s134 = smul.u32 32, %s12
          %p135 = scmp.lt.s32.totalorder %s134, 63
          %s136 = scalar_select %p135, %s134, 63
          %s137 = smul.addr %s136, 4
          %s138 = scalar_lea.vmem %s0, %s137
          %s139 = smul.u32 32, %s12
        $region28: #{tpu_custom_call.1} parent=23 // pred_fallthru
          _
      $region24: #{tpu_custom_call.1} parent=5 // pred_fallthru
        _
      %p140 = scmp.le.s32.totalorder 1, %s12
      %p141 = scmp.lt.s32.totalorder %s12, 3
      %p142 = pnand %p140, %p141
      %p143 = pneg %p142
      // Predicated region
      $region29: #{tpu_custom_call.1} parent=5 // pred_check
        _
      $region30: #{tpu_custom_call.1} parent=5 // pred_check_branch
        %145 = sbr.rel (%p142) target = $region32
      $region31: #{tpu_custom_call.1} parent=5 // pred_region
        %s146 = ssub.s32 %s12, 1
        %s147 = smul.u32 32, %s17
        %p148 = scmp.lt.s32.totalorder %s147, 63
        %s149 = scalar_select %p148, %s147, 63
        %s150 = smul.addr %s149, 4
        %s151 = scalar_lea.vmem %s0, %s150
        %p152 = pneg %p38
        %p153 = pneg %p35
        %p154 = pneg %p59
        %p155 = pneg %p56
        %p156 = pneg %p80
        %p157 = pneg %p77
        %p158 = pneg %p106
        %p159 = pneg %p103
        %s160 = sand.u32 %s93, 1
        %s161 = scalar_lea.sflag [#allocation3], %s160
        %s162 = sand.u32 %s93, 1
        %s163 = smul.addr %s162, 128
        %s164 = scalar_lea.vmem [#allocation2], %s163
        %s165 = smul.u32 32, %s17
        %p166 = scmp.lt.s32.totalorder %s165, 63
        %s167 = scalar_select %p166, %s165, 63
        %s168 = smul.addr %s167, 4
        %s169 = scalar_lea.vmem %s0, %s168
        %s170 = smul.u32 32, %s17
        %s171 = smul.u32 32, %s17
        %v173 = vld [vmem:[%s169] sm:$0xf]
        %v174 = vld [vmem:[%s169 + $0x4] sm:$0xf]
        %v175 = vld [vmem:[%s169 + $0x8] sm:$0xf]
        %v176 = vld [vmem:[%s169 + $0xc] sm:$0xf]
        %v177 = vld [vmem:[%s169 + $0x10] sm:$0xf]
        %v178 = vld [vmem:[%s169 + $0x14] sm:$0xf]
        %v179 = vld [vmem:[%s169 + $0x18] sm:$0xf]
        %v180 = vld [vmem:[%s169 + $0x1c] sm:$0xf]
        %v181 = vld [vmem:[%s169 + $0x20] sm:$0xf]
        %v182 = vld [vmem:[%s169 + $0x24] sm:$0xf]
        %v183 = vld [vmem:[%s169 + $0x28] sm:$0xf]
        %v184 = vld [vmem:[%s169 + $0x2c] sm:$0xf]
        %v185 = vld [vmem:[%s169 + $0x30] sm:$0xf]
        %v186 = vld [vmem:[%s169 + $0x34] sm:$0xf]
        %v187 = vld [vmem:[%s169 + $0x38] sm:$0xf]
        %v188 = vld [vmem:[%s169 + $0x3c] sm:$0xf]
        %v189 = vld [vmem:[%s169 + $0x40] sm:$0xf]
        %v190 = vld [vmem:[%s169 + $0x44] sm:$0xf]
        %v191 = vld [vmem:[%s169 + $0x48] sm:$0xf]
        %v192 = vld [vmem:[%s169 + $0x4c] sm:$0xf]
        %v193 = vld [vmem:[%s169 + $0x50] sm:$0xf]
        %v194 = vld [vmem:[%s169 + $0x54] sm:$0xf]
        %v195 = vld [vmem:[%s169 + $0x58] sm:$0xf]
        %v196 = vld [vmem:[%s169 + $0x5c] sm:$0xf]
        %v197 = vld [vmem:[%s169 + $0x60] sm:$0xf]
        %v198 = vld [vmem:[%s169 + $0x64] sm:$0xf]
        %v199 = vld [vmem:[%s169 + $0x68] sm:$0xf]
        %v200 = vld [vmem:[%s169 + $0x6c] sm:$0xf]
        %v201 = vld [vmem:[%s169 + $0x70] sm:$0xf]
        %v202 = vld [vmem:[%s169 + $0x74] sm:$0xf]
        %v203 = vld [vmem:[%s169 + $0x78] sm:$0xf]
        %v204 = vld [vmem:[%s169 + $0x7c] sm:$0xf]
        %v205 = vld [vmem:[%s1] sm:$0xf]
        %v206 = vld [vmem:[%s1 + $0x4] sm:$0xf]
        %v207 = vld [vmem:[%s1 + $0x8] sm:$0xf]
        %v208 = vld [vmem:[%s1 + $0xc] sm:$0x3]
        %v209 = vld [vmem:[%s2] sm:$0x1]
        %v211 = vlaneseq
        %v212 = vshrl.u32 %v211, 7
        %v213 = vsub.s32 0, %v212
        %v214 = vrot.slane %v209, %v213
        %v248 = vunpack.c.l.b16 %v173
        %v249 = vunpack.c.l.b16 %v174
        %v250 = vunpack.c.l.b16 %v175
        %v251 = vunpack.c.l.b16 %v176
        %v252 = vunpack.c.l.b16 %v177
        %v253 = vunpack.c.l.b16 %v178
        %v254 = vunpack.c.l.b16 %v179
        %v255 = vunpack.c.l.b16 %v180
        %v256 = vunpack.c.l.b16 %v181
        %v257 = vunpack.c.l.b16 %v182
        %v258 = vunpack.c.l.b16 %v183
        %v259 = vunpack.c.l.b16 %v184
        %v260 = vunpack.c.l.b16 %v185
        %v261 = vunpack.c.l.b16 %v186
        %v262 = vunpack.c.l.b16 %v187
        %v263 = vunpack.c.l.b16 %v188
        %v264 = vunpack.c.l.b16 %v189
        %v265 = vunpack.c.l.b16 %v190
        %v266 = vunpack.c.l.b16 %v191
        %v267 = vunpack.c.l.b16 %v192
        %v268 = vunpack.c.l.b16 %v193
        %v269 = vunpack.c.l.b16 %v194
        %v270 = vunpack.c.l.b16 %v195
        %v271 = vunpack.c.l.b16 %v196
        %v272 = vunpack.c.l.b16 %v197
        %v273 = vunpack.c.l.b16 %v198
        %v274 = vunpack.c.l.b16 %v199
        %v275 = vunpack.c.l.b16 %v200
        %v276 = vunpack.c.l.b16 %v201
        %v277 = vunpack.c.l.b16 %v202
        %v278 = vunpack.c.l.b16 %v203
        %v279 = vunpack.c.l.b16 %v204
        %v280 = vpack.c.b16 %v249, %v248
        %v281 = vpack.c.b16 %v251, %v250
        %v282 = vpack.c.b16 %v253, %v252
        %v283 = vpack.c.b16 %v255, %v254
        %v284 = vpack.c.b16 %v257, %v256
        %v285 = vpack.c.b16 %v259, %v258
        %v286 = vpack.c.b16 %v261, %v260
        %v287 = vpack.c.b16 %v263, %v262
        %v288 = vpack.c.b16 %v265, %v264
        %v289 = vpack.c.b16 %v267, %v266
        %v290 = vpack.c.b16 %v269, %v268
        %v291 = vpack.c.b16 %v271, %v270
        %v292 = vpack.c.b16 %v273, %v272
        %v293 = vpack.c.b16 %v275, %v274
        %v294 = vpack.c.b16 %v277, %v276
        %v295 = vpack.c.b16 %v279, %v278
        %v300 = vunpack.c.l.b16 %v205
        %v301 = vunpack.c.l.b16 %v206
        %v302 = vunpack.c.l.b16 %v207
        %v303 = vunpack.c.l.b16 %v208
        %v304 = vpack.c.b16 %v301, %v300
        %v305 = vpack.c.b16 %v303, %v302
        %vm307 = vcmask 220160
        %v309 = vsel %vm307, %v280, 0
        %v312 = vsel %vm307, %v281, 0
        %v315 = vsel %vm307, %v282, 0
        %v318 = vsel %vm307, %v283, 0
        %v321 = vsel %vm307, %v284, 0
        %v324 = vsel %vm307, %v285, 0
        %v327 = vsel %vm307, %v286, 0
        %v330 = vsel %vm307, %v287, 0
        %v333 = vsel %vm307, %v288, 0
        %v336 = vsel %vm307, %v289, 0
        %v339 = vsel %vm307, %v290, 0
        %v342 = vsel %vm307, %v291, 0
        %v345 = vsel %vm307, %v292, 0
        %v348 = vsel %vm307, %v293, 0
        %v351 = vsel %vm307, %v294, 0
        %v354 = vsel %vm307, %v295, 0
        %vm356 = vcmask 1044480
        %vm357 = vcmask 1045504
        %v358 = vsel %vm356, 4294967295, 65535
        %v359 = vsel %vm357, %v358, 0
        %v361 = vand.u32 %v305, %v359
        %363 = vmatprep.subr.bf16.mxu0 0
        %364 = vmatpush1.bf16.msra.mxu0 0
        %365 = vmatprep.subr.bf16.mxu0 0
        %366 = vmatpush1.bf16.msra.mxu0 0
        %367 = vmatprep.subr.bf16.mxu0 0
        %368 = vmatpush1.bf16.msra.mxu0 0
        %369 = vmatprep.subr.bf16.mxu0 0
        %370 = vmatpush1.bf16.msra.mxu0 0
        %371 = vmatprep.subr.bf16.mxu0 0
        %372 = vmatpush1.bf16.msra.mxu0 0
        %373 = vmatprep.subr.bf16.mxu0 0
        %374 = vmatpush1.bf16.msra.mxu0 0
        %375 = vmatprep.subr.bf16.mxu0 0
        %376 = vmatpush1.bf16.msra.mxu0 %v361
        %377 = vmatprep.subr.bf16.mxu0 0
        %378 = vmatpush1.bf16.msra.mxu0 %v304
        %379 = vmatprep.subr.bf16.mxu0 0
        %380 = vmatpush2.bf16.msra.mxu0 0
        %381 = vmatprep.subr.bf16.mxu0 0
        %382 = vmatpush2.bf16.msra.mxu0 0
        %383 = vmatprep.subr.bf16.mxu0 0
        %384 = vmatpush2.bf16.msra.mxu0 0
        %385 = vmatprep.subr.bf16.mxu0 0
        %386 = vmatpush2.bf16.msra.mxu0 0
        %387 = vmatprep.subr.bf16.mxu0 0
        %388 = vmatpush2.bf16.msra.mxu0 0
        %389 = vmatprep.subr.bf16.mxu0 0
        %390 = vmatpush2.bf16.msra.mxu0 0
        %391 = vmatprep.subr.bf16.mxu0 0
        %392 = vmatpush2.bf16.msra.mxu0 0
        %393 = vmatprep.subr.bf16.mxu0 0
        %394 = vmatpush2.bf16.msra.mxu0 0
        %395 = vmatprep.mubr.bf16.mxu0 0
        %396 = vmatmul.mubr.bf16.gmra.mxu0 %v309
        %v397 = vpop.f32.mrf.mxu0
        %v398 = vadd.f32 %v214, %v397
        %v399 = vpop.f32.mrf.mxu0
        %v400 = vpop.f32.mrf.mxu0
        %v401 = vadd.f32 %v214, %v400
        %v402 = vpop.f32.mrf.mxu0
        %403 = vmatprep.mubr.bf16.mxu0 0
        %404 = vmatmul.mubr.bf16.gmra.mxu0 %v312
        %v405 = vpop.f32.mrf.mxu0
        %v406 = vadd.f32 %v214, %v405
        %v407 = vpop.f32.mrf.mxu0
        %v408 = vpop.f32.mrf.mxu0
        %v409 = vadd.f32 %v214, %v408
        %v410 = vpop.f32.mrf.mxu0
        %411 = vmatprep.mubr.bf16.mxu0 0
        %412 = vmatmul.mubr.bf16.gmra.mxu0 %v315
        %v413 = vpop.f32.mrf.mxu0
        %v414 = vadd.f32 %v214, %v413
        %v415 = vpop.f32.mrf.mxu0
        %v416 = vpop.f32.mrf.mxu0
        %v417 = vadd.f32 %v214, %v416
        %v418 = vpop.f32.mrf.mxu0
        %419 = vmatprep.mubr.bf16.mxu0 0
        %420 = vmatmul.mubr.bf16.gmra.mxu0 %v318
        %v421 = vpop.f32.mrf.mxu0
        %v422 = vadd.f32 %v214, %v421
        %v423 = vpop.f32.mrf.mxu0
        %v424 = vpop.f32.mrf.mxu0
        %v425 = vadd.f32 %v214, %v424
        %v426 = vpop.f32.mrf.mxu0
        %427 = vmatprep.mubr.bf16.mxu0 0
        %428 = vmatmul.mubr.bf16.gmra.mxu0 %v321
        %v429 = vpop.f32.mrf.mxu0
        %v430 = vadd.f32 %v214, %v429
        %v431 = vpop.f32.mrf.mxu0
        %v432 = vpop.f32.mrf.mxu0
        %v433 = vadd.f32 %v214, %v432
        %v434 = vpop.f32.mrf.mxu0
        %435 = vmatprep.mubr.bf16.mxu0 0
        %436 = vmatmul.mubr.bf16.gmra.mxu0 %v324
        %v437 = vpop.f32.mrf.mxu0
        %v438 = vadd.f32 %v214, %v437
        %v439 = vpop.f32.mrf.mxu0
        %v440 = vpop.f32.mrf.mxu0
        %v441 = vadd.f32 %v214, %v440
        %v442 = vpop.f32.mrf.mxu0
        %443 = vmatprep.mubr.bf16.mxu0 0
        %444 = vmatmul.mubr.bf16.gmra.mxu0 %v327
        %v445 = vpop.f32.mrf.mxu0
        %v446 = vadd.f32 %v214, %v445
        %v447 = vpop.f32.mrf.mxu0
        %v448 = vpop.f32.mrf.mxu0
        %v449 = vadd.f32 %v214, %v448
        %v450 = vpop.f32.mrf.mxu0
        %451 = vmatprep.mubr.bf16.mxu0 0
        %452 = vmatmul.mubr.bf16.gmra.mxu0 %v330
        %v453 = vpop.f32.mrf.mxu0
        %v454 = vadd.f32 %v214, %v453
        %v455 = vpop.f32.mrf.mxu0
        %v456 = vpop.f32.mrf.mxu0
        %v457 = vadd.f32 %v214, %v456
        %v458 = vpop.f32.mrf.mxu0
        %459 = vmatprep.mubr.bf16.mxu0 0
        %460 = vmatmul.mubr.bf16.gmra.mxu0 %v333
        %v461 = vpop.f32.mrf.mxu0
        %v462 = vadd.f32 %v214, %v461
        %v463 = vpop.f32.mrf.mxu0
        %v464 = vpop.f32.mrf.mxu0
        %v465 = vadd.f32 %v214, %v464
        %v466 = vpop.f32.mrf.mxu0
        %467 = vmatprep.mubr.bf16.mxu0 0
        %468 = vmatmul.mubr.bf16.gmra.mxu0 %v336
        %v469 = vpop.f32.mrf.mxu0
        %v470 = vadd.f32 %v214, %v469
        %v471 = vpop.f32.mrf.mxu0
        %v472 = vpop.f32.mrf.mxu0
        %v473 = vadd.f32 %v214, %v472
        %v474 = vpop.f32.mrf.mxu0
        %475 = vmatprep.mubr.bf16.mxu0 0
        %476 = vmatmul.mubr.bf16.gmra.mxu0 %v339
        %v477 = vpop.f32.mrf.mxu0
        %v478 = vadd.f32 %v214, %v477
        %v479 = vpop.f32.mrf.mxu0
        %v480 = vpop.f32.mrf.mxu0
        %v481 = vadd.f32 %v214, %v480
        %v482 = vpop.f32.mrf.mxu0
        %483 = vmatprep.mubr.bf16.mxu0 0
        %484 = vmatmul.mubr.bf16.gmra.mxu0 %v342
        %v485 = vpop.f32.mrf.mxu0
        %v486 = vadd.f32 %v214, %v485
        %v487 = vpop.f32.mrf.mxu0
        %v488 = vpop.f32.mrf.mxu0
        %v489 = vadd.f32 %v214, %v488
        %v490 = vpop.f32.mrf.mxu0
        %491 = vmatprep.mubr.bf16.mxu0 0
        %492 = vmatmul.mubr.bf16.gmra.mxu0 %v345
        %v493 = vpop.f32.mrf.mxu0
        %v494 = vadd.f32 %v214, %v493
        %v495 = vpop.f32.mrf.mxu0
        %v496 = vpop.f32.mrf.mxu0
        %v497 = vadd.f32 %v214, %v496
        %v498 = vpop.f32.mrf.mxu0
        %499 = vmatprep.mubr.bf16.mxu0 0
        %500 = vmatmul.mubr.bf16.gmra.mxu0 %v348
        %v501 = vpop.f32.mrf.mxu0
        %v502 = vadd.f32 %v214, %v501
        %v503 = vpop.f32.mrf.mxu0
        %v504 = vpop.f32.mrf.mxu0
        %v505 = vadd.f32 %v214, %v504
        %v506 = vpop.f32.mrf.mxu0
        %507 = vmatprep.mubr.bf16.mxu0 0
        %508 = vmatmul.mubr.bf16.gmra.mxu0 %v351
        %v509 = vpop.f32.mrf.mxu0
        %v510 = vadd.f32 %v214, %v509
        %v511 = vpop.f32.mrf.mxu0
        %v512 = vpop.f32.mrf.mxu0
        %v513 = vadd.f32 %v214, %v512
        %v514 = vpop.f32.mrf.mxu0
        %515 = vmatprep.mubr.bf16.mxu0 0
        %516 = vmatmul.mubr.bf16.gmra.mxu0 %v354
        %v517 = vpop.f32.mrf.mxu0
        %v518 = vadd.f32 %v214, %v517
        %v519 = vpop.f32.mrf.mxu0
        %v520 = vpop.f32.mrf.mxu0
        %v521 = vadd.f32 %v214, %v520
        %v522 = vpop.f32.mrf.mxu0
        %523 = vdwg.mxu0
        %v524 = vmax.f32 %v398, 0.0
        %v525 = vmax.f32 %v401, 0.0
        %v526 = vmax.f32 %v406, 0.0
        %v527 = vmax.f32 %v409, 0.0
        %v528 = vmax.f32 %v414, 0.0
        %v529 = vmax.f32 %v417, 0.0
        %v530 = vmax.f32 %v422, 0.0
        %v531 = vmax.f32 %v425, 0.0
        %v532 = vmax.f32 %v430, 0.0
        %v533 = vmax.f32 %v433, 0.0
        %v534 = vmax.f32 %v438, 0.0
        %v535 = vmax.f32 %v441, 0.0
        %v536 = vmax.f32 %v446, 0.0
        %v537 = vmax.f32 %v449, 0.0
        %v538 = vmax.f32 %v454, 0.0
        %v539 = vmax.f32 %v457, 0.0
        %v540 = vmax.f32 %v462, 0.0
        %v541 = vmax.f32 %v465, 0.0
        %v542 = vmax.f32 %v470, 0.0
        %v543 = vmax.f32 %v473, 0.0
        %v544 = vmax.f32 %v478, 0.0
        %v545 = vmax.f32 %v481, 0.0
        %v546 = vmax.f32 %v486, 0.0
        %v547 = vmax.f32 %v489, 0.0
        %v548 = vmax.f32 %v494, 0.0
        %v549 = vmax.f32 %v497, 0.0
        %v550 = vmax.f32 %v502, 0.0
        %v551 = vmax.f32 %v505, 0.0
        %v552 = vmax.f32 %v510, 0.0
        %v553 = vmax.f32 %v513, 0.0
        %v554 = vmax.f32 %v518, 0.0
        %v555 = vmax.f32 %v521, 0.0
        %v556 = vmin.f32 %v524, 6.0
        %v557 = vmin.f32 %v525, 6.0
        %v558 = vmin.f32 %v526, 6.0
        %v559 = vmin.f32 %v527, 6.0
        %v560 = vmin.f32 %v528, 6.0
        %v561 = vmin.f32 %v529, 6.0
        %v562 = vmin.f32 %v530, 6.0
        %v563 = vmin.f32 %v531, 6.0
        %v564 = vmin.f32 %v532, 6.0
        %v565 = vmin.f32 %v533, 6.0
        %v566 = vmin.f32 %v534, 6.0
        %v567 = vmin.f32 %v535, 6.0
        %v568 = vmin.f32 %v536, 6.0
        %v569 = vmin.f32 %v537, 6.0
        %v570 = vmin.f32 %v538, 6.0
        %v571 = vmin.f32 %v539, 6.0
        %v572 = vmin.f32 %v540, 6.0
        %v573 = vmin.f32 %v541, 6.0
        %v574 = vmin.f32 %v542, 6.0
        %v575 = vmin.f32 %v543, 6.0
        %v576 = vmin.f32 %v544, 6.0
        %v577 = vmin.f32 %v545, 6.0
        %v578 = vmin.f32 %v546, 6.0
        %v579 = vmin.f32 %v547, 6.0
        %v580 = vmin.f32 %v548, 6.0
        %v581 = vmin.f32 %v549, 6.0
        %v582 = vmin.f32 %v550, 6.0
        %v583 = vmin.f32 %v551, 6.0
        %v584 = vmin.f32 %v552, 6.0
        %v585 = vmin.f32 %v553, 6.0
        %v586 = vmin.f32 %v554, 6.0
        %v587 = vmin.f32 %v555, 6.0
        %v588 = vpack.c.bf16 %v557, %v556
        %v589 = vpack.c.bf16 %v559, %v558
        %v590 = vpack.c.bf16 %v561, %v560
        %v591 = vpack.c.bf16 %v563, %v562
        %v592 = vpack.c.bf16 %v565, %v564
        %v593 = vpack.c.bf16 %v567, %v566
        %v594 = vpack.c.bf16 %v569, %v568
        %v595 = vpack.c.bf16 %v571, %v570
        %v596 = vpack.c.bf16 %v573, %v572
        %v597 = vpack.c.bf16 %v575, %v574
        %v598 = vpack.c.bf16 %v577, %v576
        %v599 = vpack.c.bf16 %v579, %v578
        %v600 = vpack.c.bf16 %v581, %v580
        %v601 = vpack.c.bf16 %v583, %v582
        %v602 = vpack.c.bf16 %v585, %v584
        %v603 = vpack.c.bf16 %v587, %v586
        %v620 = vunpack.c.l.b16 %v588
        %v621 = vunpack.c.h.b16 %v588
        %v622 = vunpack.c.l.b16 %v589
        %v623 = vunpack.c.h.b16 %v589
        %v624 = vunpack.c.l.b16 %v590
        %v625 = vunpack.c.h.b16 %v590
        %v626 = vunpack.c.l.b16 %v591
        %v627 = vunpack.c.h.b16 %v591
        %v628 = vunpack.c.l.b16 %v592
        %v629 = vunpack.c.h.b16 %v592
        %v630 = vunpack.c.l.b16 %v593
        %v631 = vunpack.c.h.b16 %v593
        %v632 = vunpack.c.l.b16 %v594
        %v633 = vunpack.c.h.b16 %v594
        %v634 = vunpack.c.l.b16 %v595
        %v635 = vunpack.c.h.b16 %v595
        %v636 = vunpack.c.l.b16 %v596
        %v637 = vunpack.c.h.b16 %v596
        %v638 = vunpack.c.l.b16 %v597
        %v639 = vunpack.c.h.b16 %v597
        %v640 = vunpack.c.l.b16 %v598
        %v641 = vunpack.c.h.b16 %v598
        %v642 = vunpack.c.l.b16 %v599
        %v643 = vunpack.c.h.b16 %v599
        %v644 = vunpack.c.l.b16 %v600
        %v645 = vunpack.c.h.b16 %v600
        %v646 = vunpack.c.l.b16 %v601
        %v647 = vunpack.c.h.b16 %v601
        %v648 = vunpack.c.l.b16 %v602
        %v649 = vunpack.c.h.b16 %v602
        %v650 = vunpack.c.l.b16 %v603
        %v651 = vunpack.c.h.b16 %v603
        %v652 = vpack.c.b16 %v620, %v620
        %v653 = vpack.c.b16 %v621, %v621
        %v654 = vpack.c.b16 %v622, %v622
        %v655 = vpack.c.b16 %v623, %v623
        %v656 = vpack.c.b16 %v624, %v624
        %v657 = vpack.c.b16 %v625, %v625
        %v658 = vpack.c.b16 %v626, %v626
        %v659 = vpack.c.b16 %v627, %v627
        %v660 = vpack.c.b16 %v628, %v628
        %v661 = vpack.c.b16 %v629, %v629
        %v662 = vpack.c.b16 %v630, %v630
        %v663 = vpack.c.b16 %v631, %v631
        %v664 = vpack.c.b16 %v632, %v632
        %v665 = vpack.c.b16 %v633, %v633
        %v666 = vpack.c.b16 %v634, %v634
        %v667 = vpack.c.b16 %v635, %v635
        %v668 = vpack.c.b16 %v636, %v636
        %v669 = vpack.c.b16 %v637, %v637
        %v670 = vpack.c.b16 %v638, %v638
        %v671 = vpack.c.b16 %v639, %v639
        %v672 = vpack.c.b16 %v640, %v640
        %v673 = vpack.c.b16 %v641, %v641
        %v674 = vpack.c.b16 %v642, %v642
        %v675 = vpack.c.b16 %v643, %v643
        %v676 = vpack.c.b16 %v644, %v644
        %v677 = vpack.c.b16 %v645, %v645
        %v678 = vpack.c.b16 %v646, %v646
        %v679 = vpack.c.b16 %v647, %v647
        %v680 = vpack.c.b16 %v648, %v648
        %v681 = vpack.c.b16 %v649, %v649
        %v682 = vpack.c.b16 %v650, %v650
        %v683 = vpack.c.b16 %v651, %v651
        %716 = vst [vmem:[%s164] sm:$0xf] %v652
        %717 = vst [vmem:[%s164 + $0x4] sm:$0xf] %v653
        %718 = vst [vmem:[%s164 + $0x8] sm:$0xf] %v654
        %719 = vst [vmem:[%s164 + $0xc] sm:$0xf] %v655
        %720 = vst [vmem:[%s164 + $0x10] sm:$0xf] %v656
        %721 = vst [vmem:[%s164 + $0x14] sm:$0xf] %v657
        %722 = vst [vmem:[%s164 + $0x18] sm:$0xf] %v658
        %723 = vst [vmem:[%s164 + $0x1c] sm:$0xf] %v659
        %724 = vst [vmem:[%s164 + $0x20] sm:$0xf] %v660
        %725 = vst [vmem:[%s164 + $0x24] sm:$0xf] %v661
        %726 = vst [vmem:[%s164 + $0x28] sm:$0xf] %v662
        %727 = vst [vmem:[%s164 + $0x2c] sm:$0xf] %v663
        %728 = vst [vmem:[%s164 + $0x30] sm:$0xf] %v664
        %729 = vst [vmem:[%s164 + $0x34] sm:$0xf] %v665
        %730 = vst [vmem:[%s164 + $0x38] sm:$0xf] %v666
        %731 = vst [vmem:[%s164 + $0x3c] sm:$0xf] %v667
        %732 = vst [vmem:[%s164 + $0x40] sm:$0xf] %v668
        %733 = vst [vmem:[%s164 + $0x44] sm:$0xf] %v669
        %734 = vst [vmem:[%s164 + $0x48] sm:$0xf] %v670
        %735 = vst [vmem:[%s164 + $0x4c] sm:$0xf] %v671
        %736 = vst [vmem:[%s164 + $0x50] sm:$0xf] %v672
        %737 = vst [vmem:[%s164 + $0x54] sm:$0xf] %v673
        %738 = vst [vmem:[%s164 + $0x58] sm:$0xf] %v674
        %739 = vst [vmem:[%s164 + $0x5c] sm:$0xf] %v675
        %740 = vst [vmem:[%s164 + $0x60] sm:$0xf] %v676
        %741 = vst [vmem:[%s164 + $0x64] sm:$0xf] %v677
        %742 = vst [vmem:[%s164 + $0x68] sm:$0xf] %v678
        %743 = vst [vmem:[%s164 + $0x6c] sm:$0xf] %v679
        %744 = vst [vmem:[%s164 + $0x70] sm:$0xf] %v680
        %745 = vst [vmem:[%s164 + $0x74] sm:$0xf] %v681
        %746 = vst [vmem:[%s164 + $0x78] sm:$0xf] %v682
        %747 = vst [vmem:[%s164 + $0x7c] sm:$0xf] %v683
        %s748 = sand.u32 %s93, 1
        %s749 = scalar_lea.sflag [#allocation3], %s748
        %s750 = sand.u32 %s93, 1
        %s751 = smul.addr %s750, 128
        %s752 = scalar_lea.vmem [#allocation2], %s751
        // Predicated region
        $region33: #{tpu_custom_call.1} parent=31 // pred_check
          %p753 = pneg %p103
        $region34: #{tpu_custom_call.1} parent=31 // pred_check_branch
          %755 = sbr.rel (%p753) target = $region36
        $region35: #{tpu_custom_call.1} parent=31 // pred_region
          %s756 = smul.u32 32, %s17
          %s758 = ssub.s32 2048, 2048
          %759 = vsyncadd %s749, %s758
          %s760 = smul.addr %s756, 64
          %s761 = scalar_lea.hbm %s3, %s760
          %s762 = sshll.u32 %s752, 4
          %s763 = int_to_ptr.vmem [resolvable:$true] %s762
          %768 = dma.vmem_to_hbm [thread:$0]  %s763, 2048, %s761, %s749, 64, 64, 4
        $region36: #{tpu_custom_call.1} parent=31 // pred_fallthru
          _
      $region32: #{tpu_custom_call.1} parent=5 // pred_fallthru
        _
      %p769 = scmp.le.s32.totalorder 2, %s12
      // Predicated region
      $region37: #{tpu_custom_call.1} parent=5 // pred_check
        %p770 = pneg %p769
      $region38: #{tpu_custom_call.1} parent=5 // pred_check_branch
        %772 = sbr.rel (%p770) target = $region40
      $region39: #{tpu_custom_call.1} parent=5 // pred_region
        %s773 = ssub.s32 %s12, 2
        // Predicated region
        $region41: #{tpu_custom_call.1} parent=39 // pred_check
          %p774 = pneg %p109
        $region42: #{tpu_custom_call.1} parent=39 // pred_check_branch
          %776 = sbr.rel (%p774) target = $region44
        $region43: #{tpu_custom_call.1} parent=39 // pred_region
          %s777 = sand.u32 %s94, 1
          %s778 = scalar_lea.sflag [#allocation3], %s777
          %s779 = sand.u32 %s94, 1
          %s780 = smul.addr %s779, 128
          %s781 = scalar_lea.vmem [#allocation2], %s780
          %782 = dma.done %s778, 2048
        $region44: #{tpu_custom_call.1} parent=39 // pred_fallthru
          _
      $region40: #{tpu_custom_call.1} parent=5 // pred_fallthru
        _
    $region6: #{tpu_custom_call.1} parent=1 // loop_footer
      %s16 = sadd.s32 1, %s12
    $region7: #{tpu_custom_call.1} parent=1 // loop_footer_branch
      %11 = sbr.rel target = $region3
    $region8: #{tpu_custom_call.1} parent=1 // loop_exit
      _
    %783 = vsyncpa [#allocation3], 1
    %s784 = scalar_lea.sflag [#allocation3], 1
    %785 = vsyncpa %s784, 1

</llo_original>
